<compile_context>
chip_gen: v7x
topology: tpu7x:2x2x1
jax: 0.10.0
libtpu: 0.0.40
codegen_flags: <defaults>
</compile_context>

<pallas_src>
import functools

import jax
import jax.numpy as jnp
from jax.experimental import pallas as pl
from jax.experimental.pallas import tpu as pltpu


def _round_up(x, m):
    return (x + m - 1) // m * m


def _pick_fold(b, n):
    """Fold factor F: reshape (B, N) -> (B*F, N/F) so sublanes are full."""
    if b % 8 == 0:
        return 1
    for f in (2, 4, 8):
        if n % f == 0 and (b * f) % 8 == 0:
            return f
    return 1


@functools.partial(jax.jit, static_argnames=("tile_n",))
def cen_loss_with_logits(cen_pred, cen_tar, ifunc, tile_n=None):
    """cen_pred: (B,1,H,W), cen_tar: (B,H,W), ifunc: (B,H,W) -> scalar f32."""
    B = cen_pred.shape[0]
    pred = jnp.squeeze(cen_pred, axis=1).reshape(B, -1)
    tar = cen_tar.reshape(B, -1)
    ifn = ifunc.reshape(B, -1)
    N = pred.shape[1]

    # Sublane fold: (B, N) -> (B*F, N/F). Pure row-major reshape, no HBM copy.
    F = _pick_fold(B, N)
    b_fold = B * F
    n_cols = N // F
    pred = pred.reshape(b_fold, n_cols)
    tar = tar.reshape(b_fold, n_cols)
    ifn = ifn.reshape(b_fold, n_cols)

    # ---- tile selection (VMEM-budgeted, per-generation safe) --------------
    itemsize = (jnp.dtype(pred.dtype).itemsize
                + jnp.dtype(tar.dtype).itemsize
                + jnp.dtype(ifn.dtype).itemsize)
    b_pad = _round_up(b_fold, 8)
    vmem_input_budget = 24 * 1024 * 1024            # 3 inputs x 2 buffers
    cap_cols = max(128, (vmem_input_budget // (2 * b_pad * itemsize)) // 128 * 128)
    want = 65536 if tile_n is None else tile_n
    want = max(128, (want // 128) * 128)
    tn = min(want, cap_cols, _round_up(n_cols, 128))

    grid_n_total = pl.cdiv(n_cols, tn)              # column tiles to cover N/F
    n_par = 2 if grid_n_total >= 2 else 1           # both TCs on v7x
    grid_n_per = pl.cdiv(grid_n_total, n_par)

    # Only emit the column mask if some tile is ragged or duplicated.
    needs_mask = (n_cols % tn != 0) or (grid_n_per * n_par != grid_n_total)

    def col_block(i, k):
        t = i * grid_n_per + k
        # Clamp so DMAs never target a fully out-of-bounds block; the in-kernel
        # column mask (computed from the *unclamped* index) zeroes duplicates.
        return (0, jnp.minimum(t, grid_n_total - 1))

    def kernel(pred_ref, tar_ref, ifn_ref, num_ref, den_ref):
        i = pl.program_id(0)
        k = pl.program_id(1)

        @pl.when(k == 0)
        def _():
            num_ref[...] = jnp.zeros_like(num_ref)
            den_ref[...] = jnp.zeros_like(den_ref)

        x = pred_ref[...].astype(jnp.float32)       # logits   (b_fold, tn)
        y = tar_ref[...].astype(jnp.float32)        # targets
        w = ifn_ref[...].astype(jnp.float32)        # weights

        if needs_mask:
            # Mask ragged-tail / clamped-duplicate tiles (no wrapper-side pad).
            col = ((i * grid_n_per + k) * tn
                   + jax.lax.broadcasted_iota(jnp.int32, x.shape, 1))
            valid = col < n_cols
            x = jnp.where(valid, x, 0.0)
            y = jnp.where(valid, y, 0.0)
            w = jnp.where(valid, w, 0.0)

        # Numerically-stable BCE-with-logits (PyTorch formulation):
        #   max(x, 0) - x*y + log(1 + exp(-|x|))
        bce = jnp.maximum(x, 0.0) - x * y + jnp.log1p(jnp.exp(-jnp.abs(x)))

        num_ref[...] += jnp.sum(bce * w, axis=1, keepdims=True)   # (b_fold, 1)
        den_ref[...] += jnp.sum(w, axis=1, keepdims=True)         # (b_fold, 1)

    in_spec = pl.BlockSpec((b_fold, tn), col_block)
    acc_spec = pl.BlockSpec((None, b_fold, 1), lambda i, k: (i, 0, 0))

    vmem_need = 2 * b_pad * tn * itemsize + 4 * b_pad * 128 * 4
    vmem_limit = int(min(56 * 1024 * 1024,
                         max(32 * 1024 * 1024, vmem_need * 3 // 2 + (4 << 20))))

    num_out, den_out = pl.pallas_call(
        kernel,
        out_shape=(jax.ShapeDtypeStruct((n_par, b_fold, 1), jnp.float32),
                   jax.ShapeDtypeStruct((n_par, b_fold, 1), jnp.float32)),
        grid_spec=pltpu.PrefetchScalarGridSpec(
            num_scalar_prefetch=0,
            grid=(n_par, grid_n_per),
            in_specs=[in_spec, in_spec, in_spec],
            out_specs=[acc_spec, acc_spec],
        ),
        compiler_params=pltpu.CompilerParams(
            dimension_semantics=("parallel", "arbitrary"),
            vmem_limit_bytes=vmem_limit,
        ),
    )(pred, tar, ifn)

    # Tiny JAX epilogue: combine per-core partials, undo the sublane fold,
    # per-sample normalize, batch mean.  (den == 0 -> inf/nan, same as ref.)
    num = jnp.sum(num_out[:, :, 0], axis=0).reshape(B, F).sum(axis=1)   # (B,)
    den = jnp.sum(den_out[:, :, 0], axis=0).reshape(B, F).sum(axis=1)   # (B,)
    return jnp.mean(num / den)


def _reference(cen_pred, cen_tar, ifunc):
    B = cen_pred.shape[0]
    x = jnp.squeeze(cen_pred, 1).reshape(B, -1).astype(jnp.float32)
    y = cen_tar.reshape(B, -1).astype(jnp.float32)
    w = ifunc.reshape(B, -1).astype(jnp.float32)
    bce = jnp.maximum(x, 0.0) - x * y + jnp.log1p(jnp.exp(-jnp.abs(x)))
    return jnp.mean(jnp.sum(bce * w, 1) / jnp.sum(w, 1))


if __name__ == "__main__":
    B, H, W = 2, 16, 16
    key = jax.random.PRNGKey(0)
    k1, k2, k3 = jax.random.split(key, 3)

    cen_pred = jax.random.normal(k1, (B, 1, H, W), dtype=jnp.float32)
    cen_tar = jax.random.bernoulli(k2, 0.3, (B, H, W)).astype(jnp.float32)
    # ifunc: nonnegative weights, guaranteed nonzero sum per batch element.
    ifunc = jax.random.bernoulli(k3, 0.5, (B, H, W)).astype(jnp.float32) + 0.1

    loss = cen_loss_with_logits(cen_pred, cen_tar, ifunc)
    jax.block_until_ready(loss)

    ref = _reference(cen_pred, cen_tar, ifunc)
    assert jnp.allclose(loss, ref, rtol=1e-5, atol=1e-5), (loss, ref)
    print("KERNEL_OK")
</pallas_src>

<mosaic_0001>
module attributes {stable_mosaic.version = 11 : i64} {
  func.func @kernel(%arg0: i32, %arg1: i32, %arg2: memref<8x128xf32, #tpu.memory_space<vmem>>, %arg3: memref<8x128xf32, #tpu.memory_space<vmem>>, %arg4: memref<8x128xf32, #tpu.memory_space<vmem>>, %arg5: memref<1x8x1xf32, #tpu.memory_space<vmem>>, %arg6: memref<1x8x1xf32, #tpu.memory_space<vmem>>) attributes {dimension_semantics = [#tpu.dimension_semantics<parallel>, #tpu.dimension_semantics<arbitrary>], iteration_bounds = array<i64: 1, 1>, scalar_prefetch = 0 : i64, scratch_operands = 0 : i64, tpu.core_type = #tpu.core_type<tc>, window_params = [{transform_indices = @transform_0, window_bounds = array<i64: 8, 128>}, {transform_indices = @transform_1, window_bounds = array<i64: 8, 128>}, {transform_indices = @transform_2, window_bounds = array<i64: 8, 128>}, {transform_indices = @transform_3, window_bounds = array<i64: 1, 8, 1>}, {transform_indices = @transform_4, window_bounds = array<i64: 1, 8, 1>}]} {
    %c0_i32 = arith.constant 0 : i32
    %0 = arith.cmpi eq, %arg1, %c0_i32 : i32
    %1 = arith.extui %0 : i1 to i32
    %c0_i32_0 = arith.constant 0 : i32
    %2 = arith.cmpi ne, %1, %c0_i32_0 : i32
    scf.if %2 {
      %cst_24 = arith.constant 0.000000e+00 : f32
      %47 = vector.broadcast %cst_24 : f32 to vector<8x1xf32>
      %c0_25 = arith.constant 0 : index
      %c0_26 = arith.constant 0 : index
      %c0_27 = arith.constant 0 : index
      %48 = vector.load %arg5[%c0_25, %c0_26, %c0_27] : memref<1x8x1xf32, #tpu.memory_space<vmem>>, vector<1x8x1xf32>
      %49 = vector.shape_cast %48 : vector<1x8x1xf32> to vector<8x1xf32>
      %50 = vector.shape_cast %47 : vector<8x1xf32> to vector<1x8x1xf32>
      tpu.vector_store %arg5[%c0_25, %c0_26, %c0_27], %50 {strides = array<i32>} : memref<1x8x1xf32, #tpu.memory_space<vmem>>, vector<1x8x1xf32>,
      %cst_28 = arith.constant 0.000000e+00 : f32
      %51 = vector.broadcast %cst_28 : f32 to vector<8x1xf32>
      %c0_29 = arith.constant 0 : index
      %c0_30 = arith.constant 0 : index
      %c0_31 = arith.constant 0 : index
      %52 = vector.load %arg6[%c0_29, %c0_30, %c0_31] : memref<1x8x1xf32, #tpu.memory_space<vmem>>, vector<1x8x1xf32>
      %53 = vector.shape_cast %52 : vector<1x8x1xf32> to vector<8x1xf32>
      %54 = vector.shape_cast %51 : vector<8x1xf32> to vector<1x8x1xf32>
      tpu.vector_store %arg6[%c0_29, %c0_30, %c0_31], %54 {strides = array<i32>} : memref<1x8x1xf32, #tpu.memory_space<vmem>>, vector<1x8x1xf32>,
    } else {
    }
    %c0 = arith.constant 0 : index
    %c0_1 = arith.constant 0 : index
    %3 = vector.load %arg2[%c0, %c0_1] : memref<8x128xf32, #tpu.memory_space<vmem>>, vector<8x128xf32>
    %c0_2 = arith.constant 0 : index
    %c0_3 = arith.constant 0 : index
    %4 = vector.load %arg3[%c0_2, %c0_3] : memref<8x128xf32, #tpu.memory_space<vmem>>, vector<8x128xf32>
    %c0_4 = arith.constant 0 : index
    %c0_5 = arith.constant 0 : index
    %5 = vector.load %arg4[%c0_4, %c0_5] : memref<8x128xf32, #tpu.memory_space<vmem>>, vector<8x128xf32>
    %c1_i32 = arith.constant 1 : i32
    %6 = arith.muli %arg0, %c1_i32 : i32
    %7 = arith.addi %6, %arg1 : i32
    %c128_i32 = arith.constant 128 : i32
    %8 = arith.muli %7, %c128_i32 : i32
    %9 = tpu.iota {dimensions = array<i32: 1>} : vector<8x128xi32>
    %10 = vector.broadcast %8 : i32 to vector<8x128xi32>
    %11 = arith.addi %10, %9 : vector<8x128xi32>
    %c64_i32 = arith.constant 64 : i32
    %12 = vector.broadcast %c64_i32 : i32 to vector<8x128xi32>
    %13 = arith.cmpi slt, %11, %12 : vector<8x128xi32>
    %cst = arith.constant 0.000000e+00 : f32
    %14 = vector.broadcast %cst : f32 to vector<8x128xf32>
    %15 = arith.select %13, %3, %14 : vector<8x128xi1>, vector<8x128xf32>
    %cst_6 = arith.constant 0.000000e+00 : f32
    %16 = vector.broadcast %cst_6 : f32 to vector<8x128xf32>
    %17 = arith.select %13, %4, %16 : vector<8x128xi1>, vector<8x128xf32>
    %cst_7 = arith.constant 0.000000e+00 : f32
    %18 = vector.broadcast %cst_7 : f32 to vector<8x128xf32>
    %19 = arith.select %13, %5, %18 : vector<8x128xi1>, vector<8x128xf32>
    %cst_8 = arith.constant 0.000000e+00 : f32
    %20 = vector.broadcast %cst_8 : f32 to vector<8x128xf32>
    %21 = arith.maximumf %15, %20 : vector<8x128xf32>
    %22 = arith.mulf %15, %17 : vector<8x128xf32>
    %23 = arith.subf %21, %22 : vector<8x128xf32>
    %24 = math.absf %15 : vector<8x128xf32>
    %cst_9 = arith.constant 0.000000e+00 : f32
    %25 = vector.broadcast %cst_9 : f32 to vector<8x128xf32>
    %26 = arith.subf %25, %24 : vector<8x128xf32>
    %27 = math.exp %26 : vector<8x128xf32>
    %28 = math.log1p %27 : vector<8x128xf32>
    %29 = arith.addf %23, %28 : vector<8x128xf32>
    %c0_10 = arith.constant 0 : index
    %c0_11 = arith.constant 0 : index
    %c0_12 = arith.constant 0 : index
    %30 = vector.load %arg5[%c0_10, %c0_11, %c0_12] : memref<1x8x1xf32, #tpu.memory_space<vmem>>, vector<1x8x1xf32>
    %31 = vector.shape_cast %30 : vector<1x8x1xf32> to vector<8x1xf32>
    %32 = arith.mulf %29, %19 : vector<8x128xf32>
    %cst_13 = arith.constant dense<0.000000e+00> : vector<8xf32>
    %33 = vector.multi_reduction <add>, %32, %cst_13 [1] : vector<8x128xf32> to vector<8xf32>
    %34 = vector.shape_cast %33 : vector<8xf32> to vector<8x1xf32>
    %35 = arith.addf %31, %34 : vector<8x1xf32>
    %c0_14 = arith.constant 0 : index
    %c0_15 = arith.constant 0 : index
    %c0_16 = arith.constant 0 : index
    %36 = vector.load %arg5[%c0_14, %c0_15, %c0_16] : memref<1x8x1xf32, #tpu.memory_space<vmem>>, vector<1x8x1xf32>
    %37 = vector.shape_cast %36 : vector<1x8x1xf32> to vector<8x1xf32>
    %38 = vector.shape_cast %35 : vector<8x1xf32> to vector<1x8x1xf32>
    tpu.vector_store %arg5[%c0_14, %c0_15, %c0_16], %38 {strides = array<i32>} : memref<1x8x1xf32, #tpu.memory_space<vmem>>, vector<1x8x1xf32>,
    %c0_17 = arith.constant 0 : index
    %c0_18 = arith.constant 0 : index
    %c0_19 = arith.constant 0 : index
    %39 = vector.load %arg6[%c0_17, %c0_18, %c0_19] : memref<1x8x1xf32, #tpu.memory_space<vmem>>, vector<1x8x1xf32>
    %40 = vector.shape_cast %39 : vector<1x8x1xf32> to vector<8x1xf32>
    %cst_20 = arith.constant dense<0.000000e+00> : vector<8xf32>
    %41 = vector.multi_reduction <add>, %19, %cst_20 [1] : vector<8x128xf32> to vector<8xf32>
    %42 = vector.shape_cast %41 : vector<8xf32> to vector<8x1xf32>
    %43 = arith.addf %40, %42 : vector<8x1xf32>
    %c0_21 = arith.constant 0 : index
    %c0_22 = arith.constant 0 : index
    %c0_23 = arith.constant 0 : index
    %44 = vector.load %arg6[%c0_21, %c0_22, %c0_23] : memref<1x8x1xf32, #tpu.memory_space<vmem>>, vector<1x8x1xf32>
    %45 = vector.shape_cast %44 : vector<1x8x1xf32> to vector<8x1xf32>
    %46 = vector.shape_cast %43 : vector<8x1xf32> to vector<1x8x1xf32>
    tpu.vector_store %arg6[%c0_21, %c0_22, %c0_23], %46 {strides = array<i32>} : memref<1x8x1xf32, #tpu.memory_space<vmem>>, vector<1x8x1xf32>,
    return
  }
  func.func @transform_0(%arg0: i32, %arg1: i32) -> (i32, i32) {
    %c1_i32 = arith.constant 1 : i32
    %0 = arith.muli %arg0, %c1_i32 : i32
    %1 = arith.addi %0, %arg1 : i32
    %c0_i32 = arith.constant 0 : i32
    %2 = arith.minsi %1, %c0_i32 : i32
    %c0_i32_0 = arith.constant 0 : i32
    %c0_i32_1 = arith.constant 0 : i32
    return %c0_i32_0, %2 : i32, i32
  }
  func.func @transform_1(%arg0: i32, %arg1: i32) -> (i32, i32) {
    %c1_i32 = arith.constant 1 : i32
    %0 = arith.muli %arg0, %c1_i32 : i32
    %1 = arith.addi %0, %arg1 : i32
    %c0_i32 = arith.constant 0 : i32
    %2 = arith.minsi %1, %c0_i32 : i32
    %c0_i32_0 = arith.constant 0 : i32
    %c0_i32_1 = arith.constant 0 : i32
    return %c0_i32_0, %2 : i32, i32
  }
  func.func @transform_2(%arg0: i32, %arg1: i32) -> (i32, i32) {
    %c1_i32 = arith.constant 1 : i32
    %0 = arith.muli %arg0, %c1_i32 : i32
    %1 = arith.addi %0, %arg1 : i32
    %c0_i32 = arith.constant 0 : i32
    %2 = arith.minsi %1, %c0_i32 : i32
    %c0_i32_0 = arith.constant 0 : i32
    %c0_i32_1 = arith.constant 0 : i32
    return %c0_i32_0, %2 : i32, i32
  }
  func.func @transform_3(%arg0: i32, %arg1: i32) -> (i32, i32, i32) {
    %c0_i32 = arith.constant 0 : i32
    %c0_i32_0 = arith.constant 0 : i32
    %c0_i32_1 = arith.constant 0 : i32
    return %arg0, %c0_i32, %c0_i32_0 : i32, i32, i32
  }
  func.func @transform_4(%arg0: i32, %arg1: i32) -> (i32, i32, i32) {
    %c0_i32 = arith.constant 0 : i32
    %c0_i32_0 = arith.constant 0 : i32
    %c0_i32_1 = arith.constant 0 : i32
    return %arg0, %c0_i32, %c0_i32_0 : i32, i32, i32
  }
}

</mosaic_0001>

<llo_original>
// kernel: squeeze.3
$region0: #{squeeze.3}
  %s0 = inlined_call_operand.hbm [shape: f32[2,1,16,16], index: 0, kind: input, shape index: {}]
  %s1 = inlined_call_operand.vmem [shape: f32[8,64], index: 1, kind: output, shape index: {}]
  $region1: #{squeeze.3} parent=0
    #allocation0 [shape = 'u8[16384]{0}', space=vmem, size = 0x4000, scoped, tag = 'operand span for operand 0']
    #allocation1 [shape = 's32[1]{0}', space=sflag, size = 0x4, scoped, tag = 'scoped memory for squeeze.3']
    %2 = vsyncpa [#allocation1], 0
    %s4 = ssub.s32 512, 512
    %5 = vsyncadd [#allocation1], %s4
    %s7 = sshll.u32 [#allocation0], 4
    %s8 = int_to_ptr.vmem [resolvable:$true] %s7
    %10 = dma.hbm_to_vmem [thread:$0]  %s0, 512, %s8, [#allocation1]
    %11 = dma.done [#allocation1], 512
    %v12 = vld [vmem:[#allocation0] ss:$4 sm:$0xff]
    %vm13 = vcmask 130048
    %14 = vst.msk [vmem:[%s1] sm:$0xff] %vm13, %v12
    %s15 = scalar_lea.vmem [#allocation0], 3
    %v16 = vld [vmem:[%s15] ss:$4 sm:$0xff]
    %17 = vrot.lane.b32.xlu0 %v16, 48
    %v18 = vpop.permute.xlu0 %17
    %vm19 = vcmask 523648
    %20 = vst.msk [vmem:[%s1] sm:$0xff] %vm19, %v18
    %s21 = scalar_lea.vmem [#allocation0], 2
    %v22 = vld [vmem:[%s21] ss:$4 sm:$0xff]
    %23 = vrot.lane.b32.xlu0 %v22, 32
    %v24 = vpop.permute.xlu0 %23
    %vm25 = vcmask 392448
    %26 = vst.msk [vmem:[%s1] sm:$0xff] %vm25, %v24
    %s27 = scalar_lea.vmem [#allocation0], 1
    %v28 = vld [vmem:[%s27] ss:$4 sm:$0xff]
    %29 = vrot.lane.b32.xlu0 %v28, 16
    %v30 = vpop.permute.xlu0 %29
    %vm31 = vcmask 261248
    %32 = vst.msk [vmem:[%s1] sm:$0xff] %vm31, %v30
    %33 = vsyncpa [#allocation1], 1

// kernel: cen_loss_with_logits.1
$region0: #{cen_loss_with_logits.1}
  #allocation0 [shape = 'u32[]', space=smem, size = 0x4, offset = 0x4, fixed_abs, tag = 'smem constant byte address 0x4 - core index']
  #allocation1 [shape = 'u32[144,128]{1,0:T(1,128)}', space=vmem, size = 0x12000, scoped, tag = 'internal scratch']
  %s0 = inlined_call_operand.vmem [shape: f32[8,64], index: 0, kind: input, shape index: {}]
  %s1 = inlined_call_operand.vmem [shape: f32[8,64], index: 1, kind: input, shape index: {}]
  %s2 = inlined_call_operand.vmem [shape: f32[8,64], index: 2, kind: input, shape index: {}]
  %s3 = inlined_call_operand.vmem [shape: f32[1,8,1], index: 3, kind: output, shape index: {0}]
  %s4 = inlined_call_operand.vmem [shape: f32[1,8,1], index: 4, kind: output, shape index: {1}]
  %5 = xla_tuple %s3, %s4
  %s6 = sld [smem:[#allocation0]]
  $region34: #{cen_loss_with_logits.1} parent=0
    _
  %s8 = ssub.s32 1, %s6
  %s9 = scalar_select 0, %s8, %s6
  // Predicated region
  $region2: #{cen_loss_with_logits.1} parent=0 // pred_check
    _
  $region3: #{cen_loss_with_logits.1} parent=0 // pred_check_branch
    %11 = sbr.rel (0) target = $region5
  $region4: #{cen_loss_with_logits.1} parent=0 // pred_region
    %s12 = sadd.s32 0, 0
    %p13 = scmp.lt.s32.totalorder %s12, 0
    %s14 = scalar_select %p13, %s12, 0
    %p15 = scmp.lt.s32.totalorder %s14, 0
    %s16 = scalar_select %p15, %s14, 0
    %s17 = smul.addr %s16, 8
    %s18 = scalar_lea.vmem %s0, %s17
    %s19 = sadd.s32 0, 0
    %p20 = scmp.lt.s32.totalorder %s19, 0
    %s21 = scalar_select %p20, %s19, 0
  $region5: #{cen_loss_with_logits.1} parent=0 // pred_fallthru
    _
  // Predicated region
  $region6: #{cen_loss_with_logits.1} parent=0 // pred_check
    _
  $region7: #{cen_loss_with_logits.1} parent=0 // pred_check_branch
    %23 = sbr.rel (0) target = $region9
  $region8: #{cen_loss_with_logits.1} parent=0 // pred_region
    %s24 = sadd.s32 0, 0
    %p25 = scmp.lt.s32.totalorder %s24, 0
    %s26 = scalar_select %p25, %s24, 0
    %p27 = scmp.lt.s32.totalorder %s26, 0
    %s28 = scalar_select %p27, %s26, 0
    %s29 = smul.addr %s28, 8
    %s30 = scalar_lea.vmem %s1, %s29
    %s31 = sadd.s32 0, 0
    %p32 = scmp.lt.s32.totalorder %s31, 0
    %s33 = scalar_select %p32, %s31, 0
  $region9: #{cen_loss_with_logits.1} parent=0 // pred_fallthru
    _
  // Predicated region
  $region10: #{cen_loss_with_logits.1} parent=0 // pred_check
    _
  $region11: #{cen_loss_with_logits.1} parent=0 // pred_check_branch
    %35 = sbr.rel (0) target = $region13
  $region12: #{cen_loss_with_logits.1} parent=0 // pred_region
    %s36 = sadd.s32 0, 0
    %p37 = scmp.lt.s32.totalorder %s36, 0
    %s38 = scalar_select %p37, %s36, 0
    %p39 = scmp.lt.s32.totalorder %s38, 0
    %s40 = scalar_select %p39, %s38, 0
    %s41 = smul.addr %s40, 8
    %s42 = scalar_lea.vmem %s2, %s41
    %s43 = sadd.s32 0, 0
    %p44 = scmp.lt.s32.totalorder %s43, 0
    %s45 = scalar_select %p44, %s43, 0
  $region13: #{cen_loss_with_logits.1} parent=0 // pred_fallthru
    _
  %s46 = sadd.s32 0, 0
  %p47 = scmp.lt.s32.totalorder %s46, 0
  %s48 = scalar_select %p47, %s46, 0
  %p49 = scmp.lt.s32.totalorder %s48, 0
  %s50 = scalar_select %p49, %s48, 0
  %s51 = smul.addr %s50, 8
  %s52 = scalar_lea.vmem %s0, %s51
  %s53 = sadd.s32 0, 0
  %p54 = scmp.lt.s32.totalorder %s53, 0
  %s55 = scalar_select %p54, %s53, 0
  %p56 = scmp.lt.s32.totalorder %s55, 0
  %s57 = scalar_select %p56, %s55, 0
  %s58 = smul.addr %s57, 8
  %s59 = scalar_lea.vmem %s1, %s58
  %s60 = sadd.s32 0, 0
  %p61 = scmp.lt.s32.totalorder %s60, 0
  %s62 = scalar_select %p61, %s60, 0
  %p63 = scmp.lt.s32.totalorder %s62, 0
  %s64 = scalar_select %p63, %s62, 0
  %s65 = smul.addr %s64, 8
  %s66 = scalar_lea.vmem %s2, %s65
  %s67 = sadd.s32 0, 0
  %p68 = scmp.lt.s32.totalorder %s67, 0
  %s69 = scalar_select %p68, %s67, 0
  %p70 = scmp.lt.s32.totalorder %s69, 0
  %s71 = scalar_select %p70, %s69, 0
  %s72 = smul.addr %s71, 8
  %s73 = scalar_lea.vmem %s0, %s72
  %s74 = sadd.s32 0, 0
  %p75 = scmp.lt.s32.totalorder %s74, 0
  %s76 = scalar_select %p75, %s74, 0
  %s77 = sadd.s32 0, 0
  %p78 = scmp.lt.s32.totalorder %s77, 0
  %s79 = scalar_select %p78, %s77, 0
  %p80 = scmp.lt.s32.totalorder %s79, 0
  %s81 = scalar_select %p80, %s79, 0
  %s82 = smul.addr %s81, 8
  %s83 = scalar_lea.vmem %s1, %s82
  %s84 = sadd.s32 0, 0
  %p85 = scmp.lt.s32.totalorder %s84, 0
  %s86 = scalar_select %p85, %s84, 0
  %s87 = sadd.s32 0, 0
  %p88 = scmp.lt.s32.totalorder %s87, 0
  %s89 = scalar_select %p88, %s87, 0
  %p90 = scmp.lt.s32.totalorder %s89, 0
  %s91 = scalar_select %p90, %s89, 0
  %s92 = smul.addr %s91, 8
  %s93 = scalar_lea.vmem %s2, %s92
  %s94 = sadd.s32 0, 0
  %p95 = scmp.lt.s32.totalorder %s94, 0
  %s96 = scalar_select %p95, %s94, 0
  %p97 = scmp.eq.s32.totalorder 0, 0
  // Predicated region
  $region14: #{cen_loss_with_logits.1} parent=0 // pred_check
    %p98 = pneg %p97
  $region15: #{cen_loss_with_logits.1} parent=0 // pred_check_branch
    %100 = sbr.rel (%p98) target = $region17
  $region16: #{cen_loss_with_logits.1} parent=0 // pred_region
    %vm101 = vcmask 7168
    %102 = vst.msk [vmem:[%s3] sm:$0xff] %vm101, 0.0
    %103 = vst.msk [vmem:[%s4] sm:$0xff] %vm101, 0.0
  $region17: #{cen_loss_with_logits.1} parent=0 // pred_fallthru
    _
  %v104 = vld [vmem:[%s73] sm:$0xff]
  %v105 = vld [vmem:[%s83] sm:$0xff]
  %v106 = vld [vmem:[%s93] sm:$0xff]
  %s107 = sadd.s32 0, 0
  %s108 = smul.u32 %s107, 128
  %v109 = vlaneseq
  %v110 = vand.u32 %v109, 127
  %v111 = vstv %s108
  %v112 = vadd.s32 %v111, %v110
  %vm113 = vcmp.lt.s32.totalorder %v112, 64
  %v114 = vsel %vm113, %v104, 0.0
  %v115 = vsel %vm113, %v105, 0.0
  %v116 = vsel %vm113, %v106, 0.0
  %v117 = vmax.f32 %v114, 0.0
  %v118 = vmul.f32 %v114, %v115
  %v119 = vsub.f32 %v117, %v118
  %v120 = vand.u32 2147483647, %v114
  %v121 = vsub.f32 0.0, %v120
  %v122 = vmul.f32 %v121, 1.442695
  %v123 = vpow.pop %v122
  %v124 = vadd.f32 %v123, 1.0
  %v125 = vlog2.pop %v124
  %v126 = vmul.f32 %v125, 0.6931472
  %v127 = vmul.f32 -0.5, %v123
  %v128 = vadd.f32 %v127, 1.0
  %v129 = vmul.f32 %v128, %v123
  %v130 = vand.u32 2147483647, %v123
  %vm131 = vcmp.lt.f32.partialorder %v130, 0.0004427343
  %v132 = vsel %vm131, %v129, %v126
  %v133 = vadd.f32 %v119, %v132
  %v134 = vld [vmem:[%s3] sm:$0xff]
  %v135 = vmul.f32 %v133, %v116
  %136 = vadd.xlane.f32.xlu0 %v135
  %v137 = vpop.xlane.xlu0 %136
  %v138 = vadd.f32 %v134, %v137
  %vm139 = vcmask 7168
  %140 = vst.msk [vmem:[%s3] sm:$0xff] %vm139, %v138
  %v141 = vld [vmem:[%s4] sm:$0xff]
  %142 = vadd.xlane.f32.xlu0 %v116
  %v143 = vpop.xlane.xlu0 %142
  %v144 = vadd.f32 %v141, %v143
  %145 = vst.msk [vmem:[%s4] sm:$0xff] %vm139, %v144
  // Predicated region
  $region18: #{cen_loss_with_logits.1} parent=0 // pred_check
    _
  $region19: #{cen_loss_with_logits.1} parent=0 // pred_check_branch
    %147 = sbr.rel (0) target = $region21
  $region20: #{cen_loss_with_logits.1} parent=0 // pred_region
    _
  $region21: #{cen_loss_with_logits.1} parent=0 // pred_fallthru
    _
  // Predicated region
  $region22: #{cen_loss_with_logits.1} parent=0 // pred_check
    _
  $region23: #{cen_loss_with_logits.1} parent=0 // pred_check_branch
    %149 = sbr.rel (0) target = $region25
  $region24: #{cen_loss_with_logits.1} parent=0 // pred_region
    _
  $region25: #{cen_loss_with_logits.1} parent=0 // pred_fallthru
    _
  // Predicated region
  $region26: #{cen_loss_with_logits.1} parent=0 // pred_check
    _
  $region27: #{cen_loss_with_logits.1} parent=0 // pred_check_branch
    %151 = sbr.rel (0) target = $region29
  $region28: #{cen_loss_with_logits.1} parent=0 // pred_region
    _
  $region29: #{cen_loss_with_logits.1} parent=0 // pred_fallthru
    _
  // Predicated region
  $region30: #{cen_loss_with_logits.1} parent=0 // pred_check
    _
  $region31: #{cen_loss_with_logits.1} parent=0 // pred_check_branch
    %153 = sbr.rel (0) target = $region33
  $region32: #{cen_loss_with_logits.1} parent=0 // pred_region
    _
  $region33: #{cen_loss_with_logits.1} parent=0 // pred_fallthru
    _

</llo_original>
